<compile_context>
chip_gen: v5e
topology: v5e:2x2
jax: 0.10.0
libtpu: 0.0.40
codegen_flags: <defaults>
</compile_context>

<pallas_src>
import jax
import jax.numpy as jnp
from jax.experimental import pallas as pl
from jax.experimental.pallas import tpu as pltpu

# ---- problem sizes (small, consistent with the module) ----
B = 2        # batch
CIN = 4      # n_input
COUT = 8     # n_output
L = 16       # sequence length
K = 3        # kernel_size
DIL = 2      # dilation
PAD = (K - 1) * DIL   # causal padding (== chomp size)
BN_EPS = 1e-5
KCIN = K * CIN


def fused_block_kernel(xc_ref, w_ref, b_ref, o_ref):
    # xc_ref: (B*L, K*CIN)    im2col of causal dilated taps (last tap == un-shifted x)
    # w_ref : (K*CIN, 2*COUT) [ BN-folded conv taps | 1x1 skip weight in last-tap rows ]
    # b_ref : (1, 2*COUT)     [ BN-folded conv bias | skip bias ]
    # o_ref : (B*L, COUT)
    z = jnp.dot(xc_ref[...], w_ref[...], preferred_element_type=jnp.float32) + b_ref[...]
    y = jnp.maximum(z[:, :COUT], 0.0)                 # conv -> BN(eval) -> ReLU (dropout = id)
    o_ref[...] = (y + z[:, COUT:]).astype(o_ref.dtype)  # + Res-connect (1x1 conv on x)


def casual_conv_block(x_ncl, params):
    """x_ncl: (B, CIN, L) float32 (PyTorch NCL layout). Returns (B, COUT, L)."""
    # ---- wrapper glue: weight norm, BN folding, skip folding, im2col (plain JAX) ----
    v, g = params["conv1_v"], params["conv1_g"]               # (COUT,CIN,K), (COUT,1,1)
    norm = jnp.sqrt(jnp.sum(v * v, axis=(1, 2), keepdims=True))
    w_eff = g * v / norm                                      # (COUT, CIN, K)

    # fold eval-mode BatchNorm + conv bias:  y = conv*s + ((b-mean)*s + beta)
    s = params["bn_gamma"] * jax.lax.rsqrt(params["bn_var"] + BN_EPS)          # (COUT,)
    b_conv = (params["conv1_b"] - params["bn_mean"]) * s + params["bn_beta"]   # (COUT,)

    w_kic = jnp.transpose(w_eff, (2, 1, 0)) * s[None, None, :]   # (K, CIN, COUT), BN-scaled
    w_conv = w_kic.reshape(KCIN, COUT)

    # 1x1 skip conv folded into the same matmul: last-tap rows of the im2col are x itself
    ws = jnp.transpose(params["skip_w"][:, :, 0], (1, 0))        # (CIN, COUT)
    w_skip = jnp.zeros((KCIN, COUT), jnp.float32).at[(K - 1) * CIN:, :].set(ws)

    w_big = jnp.concatenate([w_conv, w_skip], axis=1)            # (KCIN, 2*COUT)
    bias_row = jnp.concatenate([b_conv, params["skip_b"]]).reshape(1, 2 * COUT)

    # im2col of causal dilated taps (left zero-pad == padded-then-chomped PyTorch conv)
    x_nlc = jnp.transpose(x_ncl, (0, 2, 1))                      # (B, L, CIN)
    x_pad = jnp.pad(x_nlc, ((0, 0), (PAD, 0), (0, 0)))           # (B, L+PAD, CIN)
    cols = jnp.concatenate(
        [x_pad[:, k * DIL:k * DIL + L, :] for k in range(K)], axis=-1)  # (B, L, K*CIN)
    x_cols = cols.reshape(B * L, KCIN)                           # (B*L, K*CIN)

    out_flat = pl.pallas_call(
        fused_block_kernel,
        out_shape=jax.ShapeDtypeStruct((B * L, COUT), jnp.float32),
        grid=(1,),                                               # single step: whole workload
        in_specs=[
            pl.BlockSpec((B * L, KCIN), lambda i: (0, 0)),       # im2col activations
            pl.BlockSpec((KCIN, 2 * COUT), lambda i: (0, 0)),    # fused weight
            pl.BlockSpec((1, 2 * COUT), lambda i: (0, 0)),       # fused bias row
        ],
        out_specs=pl.BlockSpec((B * L, COUT), lambda i: (0, 0)),
        compiler_params=pltpu.CompilerParams(dimension_semantics=("arbitrary",)),
    )(x_cols, w_big, bias_row)

    out_nlc = out_flat.reshape(B, L, COUT)
    return jnp.transpose(out_nlc, (0, 2, 1))                     # back to NCL (B, COUT, L)


def reference(x_ncl, p):
    """Pure-JAX eval-mode reference of the PyTorch module (for self-check)."""
    v, g = p["conv1_v"], p["conv1_g"]
    w = g * v / jnp.sqrt(jnp.sum(v * v, axis=(1, 2), keepdims=True))   # (COUT,CIN,K)
    xp = jnp.pad(x_ncl, ((0, 0), (0, 0), (PAD, 0)))                    # (B,CIN,L+PAD)
    conv = sum(jnp.einsum('oi,bit->bot', w[:, :, k], xp[:, :, k * DIL:k * DIL + L])
               for k in range(K)) + p["conv1_b"][None, :, None]
    s = p["bn_gamma"] * jax.lax.rsqrt(p["bn_var"] + BN_EPS)
    y = (conv - p["bn_mean"][None, :, None]) * s[None, :, None] + p["bn_beta"][None, :, None]
    y = jnp.maximum(y, 0.0)
    res = jnp.einsum('oi,bit->bot', p["skip_w"][:, :, 0], x_ncl) + p["skip_b"][None, :, None]
    return y + res


def init_params(key):
    ks = jax.random.split(key, 6)
    return {
        # weight_norm(Conv1d): direction v (COUT, CIN, K) and magnitude g (COUT,1,1)
        "conv1_v": jax.random.normal(ks[0], (COUT, CIN, K), jnp.float32) * 0.3,
        "conv1_g": jnp.ones((COUT, 1, 1), jnp.float32)
                   + 0.1 * jax.random.normal(ks[1], (COUT, 1, 1), jnp.float32),
        "conv1_b": 0.1 * jax.random.normal(ks[2], (COUT,), jnp.float32),
        # BatchNorm1d (eval-mode running stats)
        "bn_gamma": jnp.ones((COUT,), jnp.float32),
        "bn_beta": jnp.zeros((COUT,), jnp.float32),
        "bn_mean": jnp.zeros((COUT,), jnp.float32),
        "bn_var": jnp.ones((COUT,), jnp.float32),
        # Res-connect 1x1 conv (CIN != COUT)
        "skip_w": jax.random.normal(ks[3], (COUT, CIN, 1), jnp.float32) * 0.3,
        "skip_b": 0.1 * jax.random.normal(ks[4], (COUT,), jnp.float32),
    }


if __name__ == "__main__":
    key = jax.random.PRNGKey(0)
    pkey, xkey = jax.random.split(key)
    params = init_params(pkey)
    x = jax.random.normal(xkey, (B, CIN, L), jnp.float32)   # PyTorch NCL layout

    out = casual_conv_block(x, params)
    jax.block_until_ready(out)
    assert out.shape == (B, COUT, L)

    ref = reference(x, params)
    assert jnp.allclose(out, ref, atol=2e-4, rtol=2e-4), "mismatch vs pure-JAX reference"

    print("KERNEL_OK")
</pallas_src>

<mosaic_0001>
module attributes {stable_mosaic.version = 11 : i64} {
  func.func @fused_block_kernel(%arg0: i32, %arg1: memref<32x12xf32, #tpu.memory_space<vmem>>, %arg2: memref<12x16xf32, #tpu.memory_space<vmem>>, %arg3: memref<1x16xf32, #tpu.memory_space<vmem>>, %arg4: memref<32x8xf32, #tpu.memory_space<vmem>>) attributes {dimension_semantics = [#tpu.dimension_semantics<arbitrary>], iteration_bounds = array<i64: 1>, scalar_prefetch = 0 : i64, scratch_operands = 0 : i64, tpu.core_type = #tpu.core_type<tc>, window_params = [{pipeline_mode = #tpu.pipeline_mode<synchronous>, transform_indices = @transform_0, window_bounds = array<i64: 32, 12>}, {pipeline_mode = #tpu.pipeline_mode<synchronous>, transform_indices = @transform_1, window_bounds = array<i64: 12, 16>}, {pipeline_mode = #tpu.pipeline_mode<synchronous>, transform_indices = @transform_2, window_bounds = array<i64: 1, 16>}, {pipeline_mode = #tpu.pipeline_mode<synchronous>, transform_indices = @transform_3, window_bounds = array<i64: 32, 8>}]} {
    %c0 = arith.constant 0 : index
    %c0_0 = arith.constant 0 : index
    %0 = vector.load %arg1[%c0, %c0_0] : memref<32x12xf32, #tpu.memory_space<vmem>>, vector<32x12xf32>
    %c0_1 = arith.constant 0 : index
    %c0_2 = arith.constant 0 : index
    %1 = vector.load %arg2[%c0_1, %c0_2] : memref<12x16xf32, #tpu.memory_space<vmem>>, vector<12x16xf32>
    %cst = arith.constant dense<0.000000e+00> : vector<32x16xf32>
    %2 = tpu.matmul %0, %1, %cst {dimension_numbers = #tpu.dot_dimension_numbers<[1], [0], [0], [1], [0, 0, 1, 1], [], []>} : vector<32x12xf32>, vector<12x16xf32>, vector<32x16xf32> -> vector<32x16xf32>
    %c0_3 = arith.constant 0 : index
    %c0_4 = arith.constant 0 : index
    %3 = vector.load %arg3[%c0_3, %c0_4] : memref<1x16xf32, #tpu.memory_space<vmem>>, vector<1x16xf32>
    %4 = vector.broadcast %3 : vector<1x16xf32> to vector<32x16xf32>
    %5 = arith.addf %2, %4 : vector<32x16xf32>
    %6 = vector.extract_strided_slice %5 {offsets = [0, 0], sizes = [32, 8], strides = [1, 1]} : vector<32x16xf32> to vector<32x8xf32>
    %cst_5 = arith.constant 0.000000e+00 : f32
    %7 = vector.broadcast %cst_5 : f32 to vector<32x8xf32>
    %8 = arith.maximumf %6, %7 : vector<32x8xf32>
    %9 = vector.extract_strided_slice %5 {offsets = [0, 8], sizes = [32, 8], strides = [1, 1]} : vector<32x16xf32> to vector<32x8xf32>
    %10 = arith.addf %8, %9 : vector<32x8xf32>
    %c0_6 = arith.constant 0 : index
    %c0_7 = arith.constant 0 : index
    %11 = vector.load %arg4[%c0_6, %c0_7] : memref<32x8xf32, #tpu.memory_space<vmem>>, vector<32x8xf32>
    tpu.vector_store %arg4[%c0_6, %c0_7], %10 {strides = array<i32>} : memref<32x8xf32, #tpu.memory_space<vmem>>, vector<32x8xf32>,
    return
  }
  func.func @transform_0(%arg0: i32) -> (i32, i32) {
    %c0_i32 = arith.constant 0 : i32
    %c0_i32_0 = arith.constant 0 : i32
    %c0_i32_1 = arith.constant 0 : i32
    return %c0_i32, %c0_i32_0 : i32, i32
  }
  func.func @transform_1(%arg0: i32) -> (i32, i32) {
    %c0_i32 = arith.constant 0 : i32
    %c0_i32_0 = arith.constant 0 : i32
    %c0_i32_1 = arith.constant 0 : i32
    return %c0_i32, %c0_i32_0 : i32, i32
  }
  func.func @transform_2(%arg0: i32) -> (i32, i32) {
    %c0_i32 = arith.constant 0 : i32
    %c0_i32_0 = arith.constant 0 : i32
    %c0_i32_1 = arith.constant 0 : i32
    return %c0_i32, %c0_i32_0 : i32, i32
  }
  func.func @transform_3(%arg0: i32) -> (i32, i32) {
    %c0_i32 = arith.constant 0 : i32
    %c0_i32_0 = arith.constant 0 : i32
    %c0_i32_1 = arith.constant 0 : i32
    return %c0_i32, %c0_i32_0 : i32, i32
  }
}

</mosaic_0001>

<llo_original>
// kernel: tpu_custom_call.1
$region0: #{tpu_custom_call.1}
  #allocation0 [shape = 'u32[]', space=smem, size = 0x4, offset = 0x4, fixed_abs, tag = 'smem constant byte address 0x4 - core index']
  #allocation1 [shape = 'u32[72,128]{1,0:T(1,128)}', space=vmem, size = 0x9000, scoped, tag = 'internal scratch']
  %s0 = inlined_call_operand.vmem [shape: f32[32,12], index: 0, kind: input, shape index: {}]
  %s1 = inlined_call_operand.vmem [shape: f32[12,16], index: 1, kind: input, shape index: {}]
  %s2 = inlined_call_operand.vmem [shape: f32[1,16], index: 2, kind: input, shape index: {}]
  %s3 = inlined_call_operand.vmem [shape: f32[32,8], index: 3, kind: output, shape index: {}]
  %s4 = sld [smem:[#allocation0]]
  $region22: #{tpu_custom_call.1} parent=0
    _
  %s6 = ssub.s32 1, %s4
  %s7 = scalar_select 0, %s6, %s4
  // Predicated region
  $region2: #{tpu_custom_call.1} parent=0 // pred_check
    _
  $region3: #{tpu_custom_call.1} parent=0 // pred_check_branch
    %9 = sbr.rel (0) target = $region5
  $region4: #{tpu_custom_call.1} parent=0 // pred_region
    _
  $region5: #{tpu_custom_call.1} parent=0 // pred_fallthru
    _
  // Predicated region
  $region6: #{tpu_custom_call.1} parent=0 // pred_check
    _
  $region7: #{tpu_custom_call.1} parent=0 // pred_check_branch
    %11 = sbr.rel (0) target = $region9
  $region8: #{tpu_custom_call.1} parent=0 // pred_region
    _
  $region9: #{tpu_custom_call.1} parent=0 // pred_fallthru
    _
  // Predicated region
  $region10: #{tpu_custom_call.1} parent=0 // pred_check
    _
  $region11: #{tpu_custom_call.1} parent=0 // pred_check_branch
    %13 = sbr.rel (0) target = $region13
  $region12: #{tpu_custom_call.1} parent=0 // pred_region
    _
  $region13: #{tpu_custom_call.1} parent=0 // pred_fallthru
    _
  %v14 = vld [vmem:[%s0] sm:$0xff]
  %v15 = vld [vmem:[%s0 + $0x8] sm:$0xff]
  %v16 = vld [vmem:[%s0 + $0x10] sm:$0xff]
  %v17 = vld [vmem:[%s0 + $0x18] sm:$0xff]
  %v18 = vld [vmem:[%s1] sm:$0xff]
  %v19 = vld [vmem:[%s1 + $0x8] sm:$0xf]
  %v20 = vld [vmem:[%s2] sm:$0x1]
  %v22 = vperm.slane %v20, 0
  %vm24 = vcmask 97280
  %v26 = vsel %vm24, %v14, 0
  %v29 = vsel %vm24, %v15, 0
  %v32 = vsel %vm24, %v16, 0
  %v35 = vsel %vm24, %v17, 0
  %vm37 = vcmask 1043456
  %v39 = vsel %vm37, %v19, 0
  %41 = vmatpush.msra.mxu0 0.0
  %42 = vmatpush.msra.mxu0 0.0
  %43 = vmatpush.msra.mxu0 0.0
  %44 = vmatpush.msra.mxu0 0.0
  %45 = vmatpush.msra.mxu0 0.0
  %46 = vmatpush.msra.mxu0 0.0
  %47 = vmatpush.msra.mxu0 0.0
  %48 = vmatpush.msra.mxu0 0.0
  %49 = vmatpush.msra.mxu0 0.0
  %50 = vmatpush.msra.mxu0 0.0
  %51 = vmatpush.msra.mxu0 0.0
  %52 = vmatpush.msra.mxu0 0.0
  %53 = vmatpush.msra.mxu0 0.0
  %54 = vmatpush.msra.mxu0 0.0
  %55 = vmatpush.msra.mxu0 %v39
  %56 = vmatpush.msra.mxu0 %v18
  %57 = vmatmul.f32.gmra.mxu0 %v26
  %v58 = vpop.f32.mrf.mxu0
  %v59 = vadd.f32 %v22, %v58
  %60 = vmatmul.f32.gmra.mxu0 %v29
  %v61 = vpop.f32.mrf.mxu0
  %v62 = vadd.f32 %v22, %v61
  %63 = vmatmul.f32.gmra.mxu0 %v32
  %v64 = vpop.f32.mrf.mxu0
  %v65 = vadd.f32 %v22, %v64
  %66 = vmatmul.f32.gmra.mxu0 %v35
  %v67 = vpop.f32.mrf.mxu0
  %v68 = vadd.f32 %v22, %v67
  %69 = vdwg.mxu0
  %v70 = vmax.f32 %v59, 0.0
  %v71 = vmax.f32 %v62, 0.0
  %v72 = vmax.f32 %v65, 0.0
  %v73 = vmax.f32 %v68, 0.0
  %78 = vrot.lane.b32.xlu0 %v59, 120
  %v79 = vpop.permute.xlu0 %78
  %80 = vrot.lane.b32.xlu0 %v62, 120
  %v81 = vpop.permute.xlu0 %80
  %82 = vrot.lane.b32.xlu0 %v65, 120
  %v83 = vpop.permute.xlu0 %82
  %84 = vrot.lane.b32.xlu0 %v68, 120
  %v85 = vpop.permute.xlu0 %84
  %v90 = vadd.f32 %v70, %v79
  %v91 = vadd.f32 %v71, %v81
  %v92 = vadd.f32 %v72, %v83
  %v93 = vadd.f32 %v73, %v85
  %vm94 = vcmask 64512
  %95 = vst.msk [vmem:[%s3] sm:$0xff] %vm94, %v90
  %96 = vst.msk [vmem:[%s3 + $0x8] sm:$0xff] %vm94, %v91
  %97 = vst.msk [vmem:[%s3 + $0x10] sm:$0xff] %vm94, %v92
  %98 = vst.msk [vmem:[%s3 + $0x18] sm:$0xff] %vm94, %v93
  // Predicated region
  $region14: #{tpu_custom_call.1} parent=0 // pred_check
    _
  $region15: #{tpu_custom_call.1} parent=0 // pred_check_branch
    %100 = sbr.rel (0) target = $region17
  $region16: #{tpu_custom_call.1} parent=0 // pred_region
    _
  $region17: #{tpu_custom_call.1} parent=0 // pred_fallthru
    _
  // Predicated region
  $region18: #{tpu_custom_call.1} parent=0 // pred_check
    _
  $region19: #{tpu_custom_call.1} parent=0 // pred_check_branch
    %102 = sbr.rel (0) target = $region21
  $region20: #{tpu_custom_call.1} parent=0 // pred_region
    _
  $region21: #{tpu_custom_call.1} parent=0 // pred_fallthru
    _

</llo_original>
